<compile_context>
chip_gen: v7x
topology: tpu7x:2x2x1
jax: 0.10.0
libtpu: 0.0.40
codegen_flags: <defaults>
</compile_context>

<pallas_src>
import functools

import jax
import jax.numpy as jnp
from jax.experimental import pallas as pl
from jax.experimental.pallas import tpu as pltpu


def _round_up(x, m):
    return ((x + m - 1) // m) * m


def _mlp_kernel(x_ref, w1_ref, w2_ref, o_ref):
    # fc1 (+ folded b1) on the MXU, f32 accumulation; ReLU on the VPU in f32.
    h = jnp.dot(x_ref[...], w1_ref[...], preferred_element_type=jnp.float32)
    h = jnp.maximum(h, 0.0)
    # The reserved hidden lane (value exactly 1.0 after ReLU) carries b2 through
    # the second matmul, so no bias add is needed here either.
    out = jnp.dot(h.astype(w2_ref.dtype), w2_ref[...],
                  preferred_element_type=jnp.float32)
    o_ref[...] = out.astype(o_ref.dtype)


@functools.partial(jax.jit, static_argnames=("block_b", "compute_dtype"))
def model_local_view_forward(x, w1, b1, w2, b2, *, block_b=1024,
                             compute_dtype=jnp.float32):
    """x: (B, 9) f32; w1: (9, 200); b1: (200,); w2: (200, outputs); b2: (outputs,).

    Weights are stored transposed vs. PyTorch, i.e. (in_features, out_features).
    Returns (B, outputs) float32.
    """
    B, in_features = x.shape
    hidden = w1.shape[1]
    outputs = w2.shape[1]

    # Padded, lane-friendly dims.
    k_pad = _round_up(in_features + 1, 8)        # 9 + ones col -> 16
    h_pad = _round_up(hidden + 1, 128)           # 200 + ones lane -> 256
    out_pad = _round_up(outputs, 128)            # 6 -> 128 (lane-dense stores)

    # Batch tile: multiple of 8 sublanes, capped at block_b, batch padded to it.
    tb = min(block_b, _round_up(B, 8))
    b_pad = _round_up(B, tb)
    grid = (b_pad // tb,)

    # --- Augmented weights (biases folded in, zero padding elsewhere). ---
    w1_aug = jnp.zeros((k_pad, h_pad), jnp.float32)
    w1_aug = w1_aug.at[:in_features, :hidden].set(w1.astype(jnp.float32))
    w1_aug = w1_aug.at[in_features, :hidden].set(b1.astype(jnp.float32))
    w1_aug = w1_aug.at[in_features, hidden].set(1.0)      # feeds the ones lane of h

    w2_aug = jnp.zeros((h_pad, out_pad), jnp.float32)
    w2_aug = w2_aug.at[:hidden, :outputs].set(w2.astype(jnp.float32))
    w2_aug = w2_aug.at[hidden, :outputs].set(b2.astype(jnp.float32))

    # --- Augmented input: ones column for b1, zero-padded K and batch. ---
    x_aug = jnp.zeros((b_pad, k_pad), jnp.float32)
    x_aug = x_aug.at[:B, :in_features].set(x.astype(jnp.float32))
    x_aug = x_aug.at[:, in_features].set(1.0)

    # Optional bf16 MXU inputs (f32 accumulation stays in the kernel).
    x_aug = x_aug.astype(compute_dtype)
    w1_aug = w1_aug.astype(compute_dtype)
    w2_aug = w2_aug.astype(compute_dtype)

    out_padded = pl.pallas_call(
        _mlp_kernel,
        out_shape=jax.ShapeDtypeStruct((b_pad, out_pad), jnp.float32),
        grid_spec=pltpu.PrefetchScalarGridSpec(
            num_scalar_prefetch=0,
            grid=grid,
            in_specs=[
                pl.BlockSpec((tb, k_pad), lambda i: (i, 0)),       # x tile
                pl.BlockSpec((k_pad, h_pad), lambda i: (0, 0)),    # W1 resident
                pl.BlockSpec((h_pad, out_pad), lambda i: (0, 0)),  # W2 resident
            ],
            out_specs=pl.BlockSpec((tb, out_pad), lambda i: (i, 0)),
        ),
        compiler_params=pltpu.CompilerParams(
            dimension_semantics=("parallel",)),
    )(x_aug, w1_aug, w2_aug)

    return out_padded[:B, :outputs]


def init_params(key, in_features=9, hidden=200, outputs=6):
    """Deterministic init mimicking PyTorch nn.Linear default (uniform +/- 1/sqrt(fan_in)).

    Weights are produced in (in, out) layout (transpose of PyTorch's (out, in))."""
    k1, k2, k3, k4 = jax.random.split(key, 4)
    bound1 = 1.0 / jnp.sqrt(in_features)
    bound2 = 1.0 / jnp.sqrt(hidden)
    w1 = jax.random.uniform(k1, (in_features, hidden), jnp.float32, -bound1, bound1)
    b1 = jax.random.uniform(k2, (hidden,), jnp.float32, -bound1, bound1)
    w2 = jax.random.uniform(k3, (hidden, outputs), jnp.float32, -bound2, bound2)
    b2 = jax.random.uniform(k4, (outputs,), jnp.float32, -bound2, bound2)
    return w1, b1, w2, b2


if __name__ == "__main__":
    key = jax.random.PRNGKey(0)
    k_x, k_p = jax.random.split(key)

    B, IN, HIDDEN, OUTPUTS = 8, 9, 200, 6
    x = jax.random.normal(k_x, (B, IN), jnp.float32)
    w1, b1, w2, b2 = init_params(k_p, IN, HIDDEN, OUTPUTS)

    # Small-batch test, f32 compute: bit-tight vs the plain-JAX reference.
    out = model_local_view_forward(x, w1, b1, w2, b2)
    out = jax.block_until_ready(out)
    ref = jnp.maximum(x @ w1 + b1, 0.0) @ w2 + b2
    assert out.shape == (B, OUTPUTS)
    assert jnp.allclose(out, ref, atol=1e-5, rtol=1e-5)

    # Larger batch exercising the pipelined batch grid and the bf16 MXU path.
    B2 = 2048
    x2 = jax.random.normal(k_x, (B2, IN), jnp.float32)
    out2 = model_local_view_forward(x2, w1, b1, w2, b2,
                                    block_b=1024, compute_dtype=jnp.bfloat16)
    out2 = jax.block_until_ready(out2)
    ref2 = jnp.maximum(x2 @ w1 + b1, 0.0) @ w2 + b2
    assert out2.shape == (B2, OUTPUTS)
    assert jnp.allclose(out2, ref2, atol=1e-1, rtol=1e-1)  # bf16 inputs, f32 accum

    print("KERNEL_OK")
</pallas_src>

<mosaic_0001>
module attributes {stable_mosaic.version = 11 : i64} {
  func.func @_mlp_kernel(%arg0: i32, %arg1: memref<8x16xf32, #tpu.memory_space<vmem>>, %arg2: memref<16x256xf32, #tpu.memory_space<vmem>>, %arg3: memref<256x128xf32, #tpu.memory_space<vmem>>, %arg4: memref<8x128xf32, #tpu.memory_space<vmem>>) attributes {dimension_semantics = [#tpu.dimension_semantics<parallel>], iteration_bounds = array<i64: 1>, scalar_prefetch = 0 : i64, scratch_operands = 0 : i64, tpu.core_type = #tpu.core_type<tc>, window_params = [{transform_indices = @transform_0, window_bounds = array<i64: 8, 16>}, {pipeline_mode = #tpu.pipeline_mode<synchronous>, transform_indices = @transform_1, window_bounds = array<i64: 16, 256>}, {pipeline_mode = #tpu.pipeline_mode<synchronous>, transform_indices = @transform_2, window_bounds = array<i64: 256, 128>}, {transform_indices = @transform_3, window_bounds = array<i64: 8, 128>}]} {
    %c0 = arith.constant 0 : index
    %c0_0 = arith.constant 0 : index
    %0 = vector.load %arg1[%c0, %c0_0] : memref<8x16xf32, #tpu.memory_space<vmem>>, vector<8x16xf32>
    %c0_1 = arith.constant 0 : index
    %c0_2 = arith.constant 0 : index
    %1 = vector.load %arg2[%c0_1, %c0_2] : memref<16x256xf32, #tpu.memory_space<vmem>>, vector<16x256xf32>
    %cst = arith.constant dense<0.000000e+00> : vector<8x256xf32>
    %2 = tpu.matmul %0, %1, %cst {dimension_numbers = #tpu.dot_dimension_numbers<[1], [0], [0], [1], [0, 0, 1, 1], [], []>} : vector<8x16xf32>, vector<16x256xf32>, vector<8x256xf32> -> vector<8x256xf32>
    %cst_3 = arith.constant 0.000000e+00 : f32
    %3 = vector.broadcast %cst_3 : f32 to vector<8x256xf32>
    %4 = arith.maximumf %2, %3 : vector<8x256xf32>
    %c0_4 = arith.constant 0 : index
    %c0_5 = arith.constant 0 : index
    %5 = vector.load %arg3[%c0_4, %c0_5] : memref<256x128xf32, #tpu.memory_space<vmem>>, vector<256x128xf32>
    %cst_6 = arith.constant dense<0.000000e+00> : vector<8x128xf32>
    %6 = tpu.matmul %4, %5, %cst_6 {dimension_numbers = #tpu.dot_dimension_numbers<[1], [0], [0], [1], [0, 0, 1, 1], [], []>} : vector<8x256xf32>, vector<256x128xf32>, vector<8x128xf32> -> vector<8x128xf32>
    %c0_7 = arith.constant 0 : index
    %c0_8 = arith.constant 0 : index
    %7 = vector.load %arg4[%c0_7, %c0_8] : memref<8x128xf32, #tpu.memory_space<vmem>>, vector<8x128xf32>
    tpu.vector_store %arg4[%c0_7, %c0_8], %6 {strides = array<i32>} : memref<8x128xf32, #tpu.memory_space<vmem>>, vector<8x128xf32>,
    return
  }
  func.func @transform_0(%arg0: i32) -> (i32, i32) {
    %c0_i32 = arith.constant 0 : i32
    %c0_i32_0 = arith.constant 0 : i32
    return %arg0, %c0_i32 : i32, i32
  }
  func.func @transform_1(%arg0: i32) -> (i32, i32) {
    %c0_i32 = arith.constant 0 : i32
    %c0_i32_0 = arith.constant 0 : i32
    %c0_i32_1 = arith.constant 0 : i32
    return %c0_i32, %c0_i32_0 : i32, i32
  }
  func.func @transform_2(%arg0: i32) -> (i32, i32) {
    %c0_i32 = arith.constant 0 : i32
    %c0_i32_0 = arith.constant 0 : i32
    %c0_i32_1 = arith.constant 0 : i32
    return %c0_i32, %c0_i32_0 : i32, i32
  }
  func.func @transform_3(%arg0: i32) -> (i32, i32) {
    %c0_i32 = arith.constant 0 : i32
    %c0_i32_0 = arith.constant 0 : i32
    return %arg0, %c0_i32 : i32, i32
  }
}

</mosaic_0001>

<llo_original>
// kernel: model_local_view_forward.1
$region0: #{model_local_view_forward.1}
  #allocation0 [shape = 'u32[]', space=smem, size = 0x4, offset = 0x4, fixed_abs, tag = 'smem constant byte address 0x4 - core index']
  #allocation1 [shape = 'u32[144,128]{1,0:T(1,128)}', space=vmem, size = 0x12000, scoped, tag = 'internal scratch']
  %s0 = inlined_call_operand.vmem [shape: f32[8,16], index: 0, kind: input, shape index: {}]
  %s1 = inlined_call_operand.vmem [shape: f32[16,256], index: 1, kind: input, shape index: {}]
  %s2 = inlined_call_operand.vmem [shape: f32[256,128], index: 2, kind: input, shape index: {}]
  %s3 = inlined_call_operand.hbm [shape: f32[8,128], index: 3, kind: output, shape index: {}]
  %s4 = sld [smem:[#allocation0]]
  $region22: #{model_local_view_forward.1} parent=0
    _
  %s6 = ssub.s32 1, %s4
  %s7 = scalar_select 0, %s6, %s4
  $region1: #{model_local_view_forward.1} parent=0
    #allocation2 [shape = 'u8[4096]{0}', space=vmem, size = 0x1000, scoped, tag = 'output window, operand 0, single buffered']
    #allocation3 [shape = 's32[1]{0}', space=sflag, size = 0x4, scoped, tag = 'scoped memory for model_local_view_forward.1']
    %8 = vsyncpa [#allocation3], 0
    // Predicated region
    $region2: #{model_local_view_forward.1} parent=1 // pred_check
      _
    $region3: #{model_local_view_forward.1} parent=1 // pred_check_branch
      %10 = sbr.rel (0) target = $region5
    $region4: #{model_local_view_forward.1} parent=1 // pred_region
      _
    $region5: #{model_local_view_forward.1} parent=1 // pred_fallthru
      _
    // Predicated region
    $region6: #{model_local_view_forward.1} parent=1 // pred_check
      _
    $region7: #{model_local_view_forward.1} parent=1 // pred_check_branch
      %12 = sbr.rel (0) target = $region9
    $region8: #{model_local_view_forward.1} parent=1 // pred_region
      _
    $region9: #{model_local_view_forward.1} parent=1 // pred_fallthru
      _
    // Predicated region
    $region10: #{model_local_view_forward.1} parent=1 // pred_check
      _
    $region11: #{model_local_view_forward.1} parent=1 // pred_check_branch
      %14 = sbr.rel (0) target = $region13
    $region12: #{model_local_view_forward.1} parent=1 // pred_region
      _
    $region13: #{model_local_view_forward.1} parent=1 // pred_fallthru
      _
    %v15 = vld [vmem:[%s0] sm:$0xff]
    %v16 = vld [vmem:[%s1] sm:$0xff]
    %v17 = vld [vmem:[%s1 + $0x8] sm:$0xff]
    %v18 = vld [vmem:[%s1 + $0x10] sm:$0xff]
    %v19 = vld [vmem:[%s1 + $0x18] sm:$0xff]
    %vm20 = vcmask 130048
    %v22 = vsel %vm20, %v15, 0
    %24 = vmatprep.subr.mxu0 %v17
    %25 = vmatpush1.msra.mxu0 %v16
    %26 = vmatprep.subr.mxu0 %v19
    %27 = vmatpush1.msra.mxu0 %v18
    %28 = vmatprep.subr.mxu0 0.0
    %29 = vmatpush1.msra.mxu0 0.0
    %30 = vmatprep.subr.mxu0 0.0
    %31 = vmatpush1.msra.mxu0 0.0
    %32 = vmatprep.subr.mxu0 0.0
    %33 = vmatpush1.msra.mxu0 0.0
    %34 = vmatprep.subr.mxu0 0.0
    %35 = vmatpush1.msra.mxu0 0.0
    %36 = vmatprep.subr.mxu0 0.0
    %37 = vmatpush1.msra.mxu0 0.0
    %38 = vmatprep.subr.mxu0 0.0
    %39 = vmatpush1.msra.mxu0 0.0
    %40 = vmatprep.subr.mxu0 0.0
    %41 = vmatpush1.msra.mxu0 0.0
    %42 = vmatprep.subr.mxu0 0.0
    %43 = vmatpush1.msra.mxu0 0.0
    %44 = vmatprep.subr.mxu0 0.0
    %45 = vmatpush1.msra.mxu0 0.0
    %46 = vmatprep.subr.mxu0 0.0
    %47 = vmatpush1.msra.mxu0 0.0
    %48 = vmatprep.subr.mxu0 0.0
    %49 = vmatpush1.msra.mxu0 0.0
    %50 = vmatprep.subr.mxu0 0.0
    %51 = vmatpush1.msra.mxu0 0.0
    %52 = vmatprep.subr.mxu0 0.0
    %53 = vmatpush1.msra.mxu0 0.0
    %54 = vmatprep.subr.mxu0 0.0
    %55 = vmatpush1.msra.mxu0 0.0
    %56 = vmatprep.subr.mxu0 0.0
    %57 = vmatpush1.msra.mxu0 0.0
    %58 = vmatprep.subr.mxu0 0.0
    %59 = vmatpush1.msra.mxu0 0.0
    %60 = vmatprep.subr.mxu0 0.0
    %61 = vmatpush1.msra.mxu0 0.0
    %62 = vmatprep.subr.mxu0 0.0
    %63 = vmatpush1.msra.mxu0 0.0
    %64 = vmatprep.subr.mxu0 0.0
    %65 = vmatpush1.msra.mxu0 0.0
    %66 = vmatprep.subr.mxu0 0.0
    %67 = vmatpush1.msra.mxu0 0.0
    %68 = vmatprep.subr.mxu0 0.0
    %69 = vmatpush1.msra.mxu0 0.0
    %70 = vmatprep.subr.mxu0 0.0
    %71 = vmatpush1.msra.mxu0 0.0
    %72 = vmatprep.subr.mxu0 0.0
    %73 = vmatpush1.msra.mxu0 0.0
    %74 = vmatprep.subr.mxu0 0.0
    %75 = vmatpush1.msra.mxu0 0.0
    %76 = vmatprep.subr.mxu0 0.0
    %77 = vmatpush1.msra.mxu0 0.0
    %78 = vmatprep.subr.mxu0 0.0
    %79 = vmatpush1.msra.mxu0 0.0
    %80 = vmatprep.subr.mxu0 0.0
    %81 = vmatpush1.msra.mxu0 0.0
    %82 = vmatprep.subr.mxu0 0.0
    %83 = vmatpush1.msra.mxu0 0.0
    %84 = vmatprep.subr.mxu0 0.0
    %85 = vmatpush1.msra.mxu0 0.0
    %86 = vmatprep.subr.mxu0 0.0
    %87 = vmatpush1.msra.mxu0 0.0
    %88 = vmatprep.mubr.f32.mxu0 0.0
    %89 = vmatmul.mubr.f32.gmra.mrb[0].mxu0 %v22
    %v90 = vpop.f32.mrb[0].mxu0
    %v91 = vadd.f32 0.0, %v90
    %v92 = vpop.f32.mrb[0].mxu0
    %v93 = vadd.f32 0.0, %v92
    %94 = vdwg.mxu0
    %v95 = vmax.f32 %v91, 0.0
    %v96 = vmax.f32 %v93, 0.0
    %v97 = vld [vmem:[%s2] sm:$0xff]
    %v98 = vld [vmem:[%s2 + $0x8] sm:$0xff]
    %v99 = vld [vmem:[%s2 + $0x10] sm:$0xff]
    %v100 = vld [vmem:[%s2 + $0x18] sm:$0xff]
    %v101 = vld [vmem:[%s2 + $0x20] sm:$0xff]
    %v102 = vld [vmem:[%s2 + $0x28] sm:$0xff]
    %v103 = vld [vmem:[%s2 + $0x30] sm:$0xff]
    %v104 = vld [vmem:[%s2 + $0x38] sm:$0xff]
    %v105 = vld [vmem:[%s2 + $0x40] sm:$0xff]
    %v106 = vld [vmem:[%s2 + $0x48] sm:$0xff]
    %v107 = vld [vmem:[%s2 + $0x50] sm:$0xff]
    %v108 = vld [vmem:[%s2 + $0x58] sm:$0xff]
    %v109 = vld [vmem:[%s2 + $0x60] sm:$0xff]
    %v110 = vld [vmem:[%s2 + $0x68] sm:$0xff]
    %v111 = vld [vmem:[%s2 + $0x70] sm:$0xff]
    %v112 = vld [vmem:[%s2 + $0x78] sm:$0xff]
    %v113 = vld [vmem:[%s2 + $0x80] sm:$0xff]
    %v114 = vld [vmem:[%s2 + $0x88] sm:$0xff]
    %v115 = vld [vmem:[%s2 + $0x90] sm:$0xff]
    %v116 = vld [vmem:[%s2 + $0x98] sm:$0xff]
    %v117 = vld [vmem:[%s2 + $0xa0] sm:$0xff]
    %v118 = vld [vmem:[%s2 + $0xa8] sm:$0xff]
    %v119 = vld [vmem:[%s2 + $0xb0] sm:$0xff]
    %v120 = vld [vmem:[%s2 + $0xb8] sm:$0xff]
    %v121 = vld [vmem:[%s2 + $0xc0] sm:$0xff]
    %v122 = vld [vmem:[%s2 + $0xc8] sm:$0xff]
    %v123 = vld [vmem:[%s2 + $0xd0] sm:$0xff]
    %v124 = vld [vmem:[%s2 + $0xd8] sm:$0xff]
    %v125 = vld [vmem:[%s2 + $0xe0] sm:$0xff]
    %v126 = vld [vmem:[%s2 + $0xe8] sm:$0xff]
    %v127 = vld [vmem:[%s2 + $0xf0] sm:$0xff]
    %v128 = vld [vmem:[%s2 + $0xf8] sm:$0xff]
    %129 = vmatprep.subr.mxu0 0.0
    %130 = vmatpush1.msra.mxu0 %v97
    %131 = vmatprep.subr.mxu0 0.0
    %132 = vmatpush1.msra.mxu0 %v98
    %133 = vmatprep.subr.mxu0 0.0
    %134 = vmatpush1.msra.mxu0 %v99
    %135 = vmatprep.subr.mxu0 0.0
    %136 = vmatpush1.msra.mxu0 %v100
    %137 = vmatprep.subr.mxu0 0.0
    %138 = vmatpush1.msra.mxu0 %v101
    %139 = vmatprep.subr.mxu0 0.0
    %140 = vmatpush1.msra.mxu0 %v102
    %141 = vmatprep.subr.mxu0 0.0
    %142 = vmatpush1.msra.mxu0 %v103
    %143 = vmatprep.subr.mxu0 0.0
    %144 = vmatpush1.msra.mxu0 %v104
    %145 = vmatprep.subr.mxu0 0.0
    %146 = vmatpush1.msra.mxu0 %v105
    %147 = vmatprep.subr.mxu0 0.0
    %148 = vmatpush1.msra.mxu0 %v106
    %149 = vmatprep.subr.mxu0 0.0
    %150 = vmatpush1.msra.mxu0 %v107
    %151 = vmatprep.subr.mxu0 0.0
    %152 = vmatpush1.msra.mxu0 %v108
    %153 = vmatprep.subr.mxu0 0.0
    %154 = vmatpush1.msra.mxu0 %v109
    %155 = vmatprep.subr.mxu0 0.0
    %156 = vmatpush1.msra.mxu0 %v110
    %157 = vmatprep.subr.mxu0 0.0
    %158 = vmatpush1.msra.mxu0 %v111
    %159 = vmatprep.subr.mxu0 0.0
    %160 = vmatpush1.msra.mxu0 %v112
    %161 = vmatprep.subr.mxu0 0.0
    %162 = vmatpush1.msra.mxu0 %v113
    %163 = vmatprep.subr.mxu0 0.0
    %164 = vmatpush1.msra.mxu0 %v114
    %165 = vmatprep.subr.mxu0 0.0
    %166 = vmatpush1.msra.mxu0 %v115
    %167 = vmatprep.subr.mxu0 0.0
    %168 = vmatpush1.msra.mxu0 %v116
    %169 = vmatprep.subr.mxu0 0.0
    %170 = vmatpush1.msra.mxu0 %v117
    %171 = vmatprep.subr.mxu0 0.0
    %172 = vmatpush1.msra.mxu0 %v118
    %173 = vmatprep.subr.mxu0 0.0
    %174 = vmatpush1.msra.mxu0 %v119
    %175 = vmatprep.subr.mxu0 0.0
    %176 = vmatpush1.msra.mxu0 %v120
    %177 = vmatprep.subr.mxu0 0.0
    %178 = vmatpush1.msra.mxu0 %v121
    %179 = vmatprep.subr.mxu0 0.0
    %180 = vmatpush1.msra.mxu0 %v122
    %181 = vmatprep.subr.mxu0 0.0
    %182 = vmatpush1.msra.mxu0 %v123
    %183 = vmatprep.subr.mxu0 0.0
    %184 = vmatpush1.msra.mxu0 %v124
    %185 = vmatprep.subr.mxu0 0.0
    %186 = vmatpush1.msra.mxu0 %v125
    %187 = vmatprep.subr.mxu0 0.0
    %188 = vmatpush1.msra.mxu0 %v126
    %189 = vmatprep.subr.mxu0 0.0
    %190 = vmatpush1.msra.mxu0 %v127
    %191 = vmatprep.subr.mxu0 0.0
    %192 = vmatpush1.msra.mxu0 %v128
    %193 = vmatprep.mubr.f32.mxu0 %v96
    %194 = vmatmul.mubr.f32.gmra.mrb[0].mxu0 %v95
    %v195 = vpop.f32.mrb[0].mxu0
    %v196 = vadd.f32 0.0, %v195
    %v197 = vpop.f32.mrb[0].mxu0
    %198 = vdwg.mxu0
    %199 = vst [vmem:[#allocation2] sm:$0xff] %v196
    // Predicated region
    $region14: #{model_local_view_forward.1} parent=1 // pred_check
      _
    $region15: #{model_local_view_forward.1} parent=1 // pred_check_branch
      %201 = sbr.rel (0) target = $region17
    $region16: #{model_local_view_forward.1} parent=1 // pred_region
      %s203 = ssub.s32 128, 128
      %204 = vsyncadd [#allocation3], %s203
      %s206 = sshll.u32 [#allocation2], 4
      %s207 = int_to_ptr.vmem [resolvable:$true] %s206
      %209 = dma.vmem_to_hbm [thread:$0]  %s207, 128, %s3, [#allocation3]
    $region17: #{model_local_view_forward.1} parent=1 // pred_fallthru
      _
    // Predicated region
    $region18: #{model_local_view_forward.1} parent=1 // pred_check
      _
    $region19: #{model_local_view_forward.1} parent=1 // pred_check_branch
      %211 = sbr.rel (0) target = $region21
    $region20: #{model_local_view_forward.1} parent=1 // pred_region
      %212 = dma.done [#allocation3], 128
    $region21: #{model_local_view_forward.1} parent=1 // pred_fallthru
      _
    %213 = vsyncpa [#allocation3], 1

</llo_original>
